<compile_context>
chip_gen: v7x
topology: tpu7x:2x2x1
jax: 0.10.0
libtpu: 0.0.40
codegen_flags: <defaults>
</compile_context>

<pallas_src>
import jax
import jax.numpy as jnp
from jax.experimental import pallas as pl
from jax.experimental.pallas import tpu as pltpu


def _round_up(x, m):
    return (x + m - 1) // m * m


# ----------------------------- Pallas kernel -------------------------------

def _two_layer_ce_kernel(x_ref, w1_ref, b1_ref, a_ref, w2_ref, b2_ref,
                         z1_ref, logp_ref):
    # fc1: (TM, K) bf16 @ (K, F) bf16 -> f32 accumulator, then + bias (f32).
    z1 = jnp.dot(x_ref[...], w1_ref[...],
                 preferred_element_type=jnp.float32) + b1_ref[...]
    z1_ref[...] = z1.astype(z1_ref.dtype)          # first output: PRE-activation

    # PReLU with a single shared parameter, read as a scalar from SMEM.
    a = a_ref[0, 0]
    a1 = jnp.where(z1 >= 0.0, z1, a * z1)

    # fc2: (TM, F) @ (F, C) on the MXU in bf16, f32 accumulate, + bias.
    z2 = jnp.dot(a1.astype(w2_ref.dtype), w2_ref[...],
                 preferred_element_type=jnp.float32) + b2_ref[...]

    # Numerically-stable log_softmax on the f32 logits.
    m = jnp.max(z2, axis=-1, keepdims=True)
    lse = m + jnp.log(jnp.sum(jnp.exp(z2 - m), axis=-1, keepdims=True))
    logp_ref[...] = (z2 - lse).astype(logp_ref.dtype)


# ------------------------------- wrapper ------------------------------------

def two_layer_ce_forward(params, x, *, tile_m=256):
    """Matches torch two_layer_ce.forward: returns (z1, log_softmax(z2))."""
    B = x.shape[0]
    x2d = x.reshape(B, -1).astype(jnp.float32)          # nn.Flatten()
    K = x2d.shape[1]
    F = params["w1"].shape[1]
    C = params["w2"].shape[1]

    # Row-tile size: multiple of 8 sublanes, capped at tile_m; pad ragged batch.
    TM = min(tile_m, _round_up(B, 8))
    Bp = _round_up(B, TM)
    if Bp != B:
        x2d = jnp.pad(x2d, ((0, Bp - B), (0, 0)))

    # bf16 operands for the MXU; biases / PReLU scalar stay f32.
    x_bf = x2d.astype(jnp.bfloat16)
    w1_bf = params["w1"].astype(jnp.bfloat16)
    w2_bf = params["w2"].astype(jnp.bfloat16)
    b1 = params["b1"].reshape(1, F).astype(jnp.float32)
    b2 = params["b2"].reshape(1, C).astype(jnp.float32)
    a = params["prelu_a"].reshape(1, 1).astype(jnp.float32)

    z1, logp = pl.pallas_call(
        _two_layer_ce_kernel,
        out_shape=(jax.ShapeDtypeStruct((Bp, F), jnp.float32),
                   jax.ShapeDtypeStruct((Bp, C), jnp.float32)),
        grid_spec=pltpu.PrefetchScalarGridSpec(
            num_scalar_prefetch=0,
            grid=(Bp // TM,),
            in_specs=[
                pl.BlockSpec((TM, K), lambda i: (i, 0)),            # x row tile
                pl.BlockSpec((K, F), lambda i: (0, 0)),             # w1 resident
                pl.BlockSpec((1, F), lambda i: (0, 0)),             # b1 resident
                pl.BlockSpec(memory_space=pltpu.MemorySpace.SMEM),  # PReLU scalar
                pl.BlockSpec((F, C), lambda i: (0, 0)),             # w2 resident
                pl.BlockSpec((1, C), lambda i: (0, 0)),             # b2 resident
            ],
            out_specs=[
                pl.BlockSpec((TM, F), lambda i: (i, 0)),            # z1
                pl.BlockSpec((TM, C), lambda i: (i, 0)),            # log_softmax
            ],
        ),
        compiler_params=pltpu.CompilerParams(
            dimension_semantics=("parallel",)),
    )(x_bf, w1_bf, b1, a, w2_bf, b2)

    return z1[:B], logp[:B]


# ------------------------------ init & main ---------------------------------

def init_params(key, input_size, feat_dim, num_classes):
    k1, k2, k3, k4 = jax.random.split(key, 4)
    bound1 = 1.0 / jnp.sqrt(input_size)
    bound2 = 1.0 / jnp.sqrt(feat_dim)
    return {
        # Linear weights stored (in_features, out_features).
        "w1": jax.random.uniform(k1, (input_size, feat_dim), jnp.float32,
                                 -bound1, bound1),
        "b1": jax.random.uniform(k2, (feat_dim,), jnp.float32, -bound1, bound1),
        "w2": jax.random.uniform(k3, (feat_dim, num_classes), jnp.float32,
                                 -bound2, bound2),
        "b2": jax.random.uniform(k4, (num_classes,), jnp.float32,
                                 -bound2, bound2),
        "prelu_a": jnp.array([0.25], jnp.float32),    # nn.PReLU() default
    }


def _reference_forward(params, x):
    # Pure-JAX reference (f32) of the torch module, for a sanity check.
    B = x.shape[0]
    x2d = x.reshape(B, -1).astype(jnp.float32)
    z1 = x2d @ params["w1"] + params["b1"]
    a = params["prelu_a"][0]
    a1 = jnp.where(z1 >= 0.0, z1, a * z1)
    z2 = a1 @ params["w2"] + params["b2"]
    return z1, jax.nn.log_softmax(z2, axis=-1)


if __name__ == "__main__":
    # Shapes consistent with the module: x is flattened, so input_size = 4*16*16.
    B, Cin, H, W = 2, 4, 16, 16
    input_size, feat_dim, num_classes = Cin * H * W, 2, 10

    key = jax.random.PRNGKey(0)
    pkey, xkey = jax.random.split(key)
    params = init_params(pkey, input_size, feat_dim, num_classes)
    x = jax.random.normal(xkey, (B, Cin, H, W), jnp.float32)

    z1, logp = jax.jit(two_layer_ce_forward)(params, x)
    jax.block_until_ready((z1, logp))

    assert z1.shape == (B, feat_dim) and logp.shape == (B, num_classes)

    # Loose tolerance: kernel matmuls are bf16 with f32 accumulation.
    z1_ref, logp_ref = _reference_forward(params, x)
    assert jnp.allclose(z1, z1_ref, rtol=1e-1, atol=1e-1)
    assert jnp.allclose(logp, logp_ref, rtol=1e-1, atol=1e-1)

    print("KERNEL_OK")
</pallas_src>

<mosaic_0001>
module attributes {stable_mosaic.version = 11 : i64} {
  func.func @_two_layer_ce_kernel(%arg0: i32, %arg1: memref<8x1024xbf16, #tpu.memory_space<vmem>>, %arg2: memref<1024x2xbf16, #tpu.memory_space<vmem>>, %arg3: memref<1x2xf32, #tpu.memory_space<vmem>>, %arg4: memref<1x1xf32, #tpu.memory_space<smem>>, %arg5: memref<2x10xbf16, #tpu.memory_space<vmem>>, %arg6: memref<1x10xf32, #tpu.memory_space<vmem>>, %arg7: memref<8x2xf32, #tpu.memory_space<vmem>>, %arg8: memref<8x10xf32, #tpu.memory_space<vmem>>) attributes {dimension_semantics = [#tpu.dimension_semantics<parallel>], iteration_bounds = array<i64: 1>, scalar_prefetch = 0 : i64, scratch_operands = 0 : i64, tpu.core_type = #tpu.core_type<tc>, window_params = [{transform_indices = @transform_0, window_bounds = array<i64: 8, 1024>}, {pipeline_mode = #tpu.pipeline_mode<synchronous>, transform_indices = @transform_1, window_bounds = array<i64: 1024, 2>}, {pipeline_mode = #tpu.pipeline_mode<synchronous>, transform_indices = @transform_2, window_bounds = array<i64: 1, 2>}, {transform_indices = @transform_3, window_bounds = array<i64: 1, 1>}, {pipeline_mode = #tpu.pipeline_mode<synchronous>, transform_indices = @transform_4, window_bounds = array<i64: 2, 10>}, {pipeline_mode = #tpu.pipeline_mode<synchronous>, transform_indices = @transform_5, window_bounds = array<i64: 1, 10>}, {transform_indices = @transform_6, window_bounds = array<i64: 8, 2>}, {transform_indices = @transform_7, window_bounds = array<i64: 8, 10>}]} {
    %c0 = arith.constant 0 : index
    %c0_0 = arith.constant 0 : index
    %0 = vector.load %arg1[%c0, %c0_0] : memref<8x1024xbf16, #tpu.memory_space<vmem>>, vector<8x1024xbf16>
    %c0_1 = arith.constant 0 : index
    %c0_2 = arith.constant 0 : index
    %1 = vector.load %arg2[%c0_1, %c0_2] : memref<1024x2xbf16, #tpu.memory_space<vmem>>, vector<1024x2xbf16>
    %cst = arith.constant dense<0.000000e+00> : vector<8x2xf32>
    %2 = tpu.matmul %0, %1, %cst {dimension_numbers = #tpu.dot_dimension_numbers<[1], [0], [0], [1], [0, 0, 1, 1], [], []>} : vector<8x1024xbf16>, vector<1024x2xbf16>, vector<8x2xf32> -> vector<8x2xf32>
    %c0_3 = arith.constant 0 : index
    %c0_4 = arith.constant 0 : index
    %3 = vector.load %arg3[%c0_3, %c0_4] : memref<1x2xf32, #tpu.memory_space<vmem>>, vector<1x2xf32>
    %4 = vector.broadcast %3 : vector<1x2xf32> to vector<8x2xf32>
    %5 = arith.addf %2, %4 : vector<8x2xf32>
    %c0_5 = arith.constant 0 : index
    %c0_6 = arith.constant 0 : index
    %6 = vector.load %arg7[%c0_5, %c0_6] : memref<8x2xf32, #tpu.memory_space<vmem>>, vector<8x2xf32>
    tpu.vector_store %arg7[%c0_5, %c0_6], %5 {strides = array<i32>} : memref<8x2xf32, #tpu.memory_space<vmem>>, vector<8x2xf32>,
    %c0_7 = arith.constant 0 : index
    %c0_8 = arith.constant 0 : index
    %7 = memref.load %arg4[%c0_7, %c0_8] : memref<1x1xf32, #tpu.memory_space<smem>>
    %cst_9 = arith.constant 0.000000e+00 : f32
    %8 = vector.broadcast %cst_9 : f32 to vector<8x2xf32>
    %9 = arith.cmpf oge, %5, %8 : vector<8x2xf32>
    %10 = vector.broadcast %7 : f32 to vector<8x2xf32>
    %11 = arith.mulf %10, %5 : vector<8x2xf32>
    %12 = arith.select %9, %5, %11 : vector<8x2xi1>, vector<8x2xf32>
    %13 = arith.truncf %12 : vector<8x2xf32> to vector<8x2xbf16>
    %c0_10 = arith.constant 0 : index
    %c0_11 = arith.constant 0 : index
    %14 = vector.load %arg5[%c0_10, %c0_11] : memref<2x10xbf16, #tpu.memory_space<vmem>>, vector<2x10xbf16>
    %cst_12 = arith.constant dense<0.000000e+00> : vector<8x10xf32>
    %15 = tpu.matmul %13, %14, %cst_12 {dimension_numbers = #tpu.dot_dimension_numbers<[1], [0], [0], [1], [0, 0, 1, 1], [], []>} : vector<8x2xbf16>, vector<2x10xbf16>, vector<8x10xf32> -> vector<8x10xf32>
    %c0_13 = arith.constant 0 : index
    %c0_14 = arith.constant 0 : index
    %16 = vector.load %arg6[%c0_13, %c0_14] : memref<1x10xf32, #tpu.memory_space<vmem>>, vector<1x10xf32>
    %17 = vector.broadcast %16 : vector<1x10xf32> to vector<8x10xf32>
    %18 = arith.addf %15, %17 : vector<8x10xf32>
    %cst_15 = arith.constant dense<0xFF800000> : vector<8xf32>
    %19 = vector.multi_reduction <maximumf>, %18, %cst_15 [1] : vector<8x10xf32> to vector<8xf32>
    %20 = vector.shape_cast %19 : vector<8xf32> to vector<8x1xf32>
    %21 = vector.broadcast %20 : vector<8x1xf32> to vector<8x10xf32>
    %22 = arith.subf %18, %21 : vector<8x10xf32>
    %23 = math.exp %22 : vector<8x10xf32>
    %cst_16 = arith.constant dense<0.000000e+00> : vector<8xf32>
    %24 = vector.multi_reduction <add>, %23, %cst_16 [1] : vector<8x10xf32> to vector<8xf32>
    %25 = vector.shape_cast %24 : vector<8xf32> to vector<8x1xf32>
    %26 = math.log %25 : vector<8x1xf32>
    %27 = arith.addf %20, %26 : vector<8x1xf32>
    %28 = vector.broadcast %27 : vector<8x1xf32> to vector<8x10xf32>
    %29 = arith.subf %18, %28 : vector<8x10xf32>
    %c0_17 = arith.constant 0 : index
    %c0_18 = arith.constant 0 : index
    %30 = vector.load %arg8[%c0_17, %c0_18] : memref<8x10xf32, #tpu.memory_space<vmem>>, vector<8x10xf32>
    tpu.vector_store %arg8[%c0_17, %c0_18], %29 {strides = array<i32>} : memref<8x10xf32, #tpu.memory_space<vmem>>, vector<8x10xf32>,
    return
  }
  func.func @transform_0(%arg0: i32) -> (i32, i32) {
    %c0_i32 = arith.constant 0 : i32
    %c0_i32_0 = arith.constant 0 : i32
    return %arg0, %c0_i32 : i32, i32
  }
  func.func @transform_1(%arg0: i32) -> (i32, i32) {
    %c0_i32 = arith.constant 0 : i32
    %c0_i32_0 = arith.constant 0 : i32
    %c0_i32_1 = arith.constant 0 : i32
    return %c0_i32, %c0_i32_0 : i32, i32
  }
  func.func @transform_2(%arg0: i32) -> (i32, i32) {
    %c0_i32 = arith.constant 0 : i32
    %c0_i32_0 = arith.constant 0 : i32
    %c0_i32_1 = arith.constant 0 : i32
    return %c0_i32, %c0_i32_0 : i32, i32
  }
  func.func @transform_3(%arg0: i32) -> (i32, i32) {
    %c0_i32 = arith.constant 0 : i32
    %c0_i32_0 = arith.constant 0 : i32
    %c0_i32_1 = arith.constant 0 : i32
    return %c0_i32, %c0_i32_0 : i32, i32
  }
  func.func @transform_4(%arg0: i32) -> (i32, i32) {
    %c0_i32 = arith.constant 0 : i32
    %c0_i32_0 = arith.constant 0 : i32
    %c0_i32_1 = arith.constant 0 : i32
    return %c0_i32, %c0_i32_0 : i32, i32
  }
  func.func @transform_5(%arg0: i32) -> (i32, i32) {
    %c0_i32 = arith.constant 0 : i32
    %c0_i32_0 = arith.constant 0 : i32
    %c0_i32_1 = arith.constant 0 : i32
    return %c0_i32, %c0_i32_0 : i32, i32
  }
  func.func @transform_6(%arg0: i32) -> (i32, i32) {
    %c0_i32 = arith.constant 0 : i32
    %c0_i32_0 = arith.constant 0 : i32
    return %arg0, %c0_i32 : i32, i32
  }
  func.func @transform_7(%arg0: i32) -> (i32, i32) {
    %c0_i32 = arith.constant 0 : i32
    %c0_i32_0 = arith.constant 0 : i32
    return %arg0, %c0_i32 : i32, i32
  }
}

</mosaic_0001>

<llo_original>
// kernel: two_layer_ce_forward.1
$region0: #{two_layer_ce_forward.1}
  #allocation0 [shape = 'u32[]', space=smem, size = 0x4, offset = 0x4, fixed_abs, tag = 'smem constant byte address 0x4 - core index']
  #allocation1 [shape = 'u32[144,128]{1,0:T(1,128)}', space=vmem, size = 0x12000, scoped, tag = 'internal scratch']
  #allocation2 [shape = 'f32[1,1]{1,0:T(1,128)S(6)}', space=smem, size = 0x200, scoped, tag = 'scoped memory for two_layer_ce_forward.1']
  %s0 = inlined_call_operand.vmem [shape: bf16[8,1024], index: 0, kind: input, shape index: {}]
  %s1 = inlined_call_operand.vmem [shape: bf16[1024,2], index: 1, kind: input, shape index: {}]
  %s2 = inlined_call_operand.vmem [shape: f32[1,2], index: 2, kind: input, shape index: {}]
  %s3 = inlined_call_operand.<no memory space> [shape: f32[1,1], index: 3, kind: input, shape index: {}]
  %s4 = inlined_call_operand.vmem [shape: bf16[2,10], index: 4, kind: input, shape index: {}]
  %s5 = inlined_call_operand.vmem [shape: f32[1,10], index: 5, kind: input, shape index: {}]
  %s6 = inlined_call_operand.vmem [shape: f32[8,2], index: 6, kind: output, shape index: {0}]
  %s7 = inlined_call_operand.vmem [shape: f32[8,10], index: 7, kind: output, shape index: {1}]
  %8 = xla_tuple %s6, %s7
  %s9 = sld [smem:[#allocation0]]
  $region42: #{two_layer_ce_forward.1} parent=0
    _
  %s11 = ssub.s32 1, %s9
  %s12 = scalar_select 0, %s11, %s9
  %13 = sst [smem:[#allocation2]] %s3
  // Predicated region
  $region2: #{two_layer_ce_forward.1} parent=0 // pred_check
    _
  $region3: #{two_layer_ce_forward.1} parent=0 // pred_check_branch
    %15 = sbr.rel (0) target = $region5
  $region4: #{two_layer_ce_forward.1} parent=0 // pred_region
    _
  $region5: #{two_layer_ce_forward.1} parent=0 // pred_fallthru
    _
  // Predicated region
  $region6: #{two_layer_ce_forward.1} parent=0 // pred_check
    _
  $region7: #{two_layer_ce_forward.1} parent=0 // pred_check_branch
    %17 = sbr.rel (0) target = $region9
  $region8: #{two_layer_ce_forward.1} parent=0 // pred_region
    _
  $region9: #{two_layer_ce_forward.1} parent=0 // pred_fallthru
    _
  // Predicated region
  $region10: #{two_layer_ce_forward.1} parent=0 // pred_check
    _
  $region11: #{two_layer_ce_forward.1} parent=0 // pred_check_branch
    %19 = sbr.rel (0) target = $region13
  $region12: #{two_layer_ce_forward.1} parent=0 // pred_region
    _
  $region13: #{two_layer_ce_forward.1} parent=0 // pred_fallthru
    _
  // Predicated region
  $region14: #{two_layer_ce_forward.1} parent=0 // pred_check
    _
  $region15: #{two_layer_ce_forward.1} parent=0 // pred_check_branch
    %21 = sbr.rel (0) target = $region17
  $region16: #{two_layer_ce_forward.1} parent=0 // pred_region
    _
  $region17: #{two_layer_ce_forward.1} parent=0 // pred_fallthru
    _
  // Predicated region
  $region18: #{two_layer_ce_forward.1} parent=0 // pred_check
    _
  $region19: #{two_layer_ce_forward.1} parent=0 // pred_check_branch
    %23 = sbr.rel (0) target = $region21
  $region20: #{two_layer_ce_forward.1} parent=0 // pred_region
    _
  $region21: #{two_layer_ce_forward.1} parent=0 // pred_fallthru
    _
  // Predicated region
  $region22: #{two_layer_ce_forward.1} parent=0 // pred_check
    _
  $region23: #{two_layer_ce_forward.1} parent=0 // pred_check_branch
    %25 = sbr.rel (0) target = $region25
  $region24: #{two_layer_ce_forward.1} parent=0 // pred_region
    _
  $region25: #{two_layer_ce_forward.1} parent=0 // pred_fallthru
    _
  %v27 = vld [vmem:[%s0] sm:$0xff]
  %v28 = vld [vmem:[%s0 + $0x8] sm:$0xff]
  %v29 = vld [vmem:[%s0 + $0x10] sm:$0xff]
  %v30 = vld [vmem:[%s0 + $0x18] sm:$0xff]
  %v31 = vld [vmem:[%s1] sm:$0xf]
  %v32 = vld [vmem:[%s1 + $0x4] sm:$0xf]
  %v33 = vld [vmem:[%s1 + $0x8] sm:$0xf]
  %v34 = vld [vmem:[%s1 + $0xc] sm:$0xf]
  %v35 = vld [vmem:[%s1 + $0x10] sm:$0xf]
  %v36 = vld [vmem:[%s1 + $0x14] sm:$0xf]
  %v37 = vld [vmem:[%s1 + $0x18] sm:$0xf]
  %v38 = vld [vmem:[%s1 + $0x1c] sm:$0xf]
  %v39 = vld [vmem:[%s1 + $0x20] sm:$0xf]
  %v40 = vld [vmem:[%s1 + $0x24] sm:$0xf]
  %v41 = vld [vmem:[%s1 + $0x28] sm:$0xf]
  %v42 = vld [vmem:[%s1 + $0x2c] sm:$0xf]
  %v43 = vld [vmem:[%s1 + $0x30] sm:$0xf]
  %v44 = vld [vmem:[%s1 + $0x34] sm:$0xf]
  %v45 = vld [vmem:[%s1 + $0x38] sm:$0xf]
  %v46 = vld [vmem:[%s1 + $0x3c] sm:$0xf]
  %v47 = vld [vmem:[%s1 + $0x40] sm:$0xf]
  %v48 = vld [vmem:[%s1 + $0x44] sm:$0xf]
  %v49 = vld [vmem:[%s1 + $0x48] sm:$0xf]
  %v50 = vld [vmem:[%s1 + $0x4c] sm:$0xf]
  %v51 = vld [vmem:[%s1 + $0x50] sm:$0xf]
  %v52 = vld [vmem:[%s1 + $0x54] sm:$0xf]
  %v53 = vld [vmem:[%s1 + $0x58] sm:$0xf]
  %v54 = vld [vmem:[%s1 + $0x5c] sm:$0xf]
  %v55 = vld [vmem:[%s1 + $0x60] sm:$0xf]
  %v56 = vld [vmem:[%s1 + $0x64] sm:$0xf]
  %v57 = vld [vmem:[%s1 + $0x68] sm:$0xf]
  %v58 = vld [vmem:[%s1 + $0x6c] sm:$0xf]
  %v59 = vld [vmem:[%s1 + $0x70] sm:$0xf]
  %v60 = vld [vmem:[%s1 + $0x74] sm:$0xf]
  %v61 = vld [vmem:[%s1 + $0x78] sm:$0xf]
  %v62 = vld [vmem:[%s1 + $0x7c] sm:$0xf]
  %v63 = vld [vmem:[%s1 + $0x80] sm:$0xf]
  %v64 = vld [vmem:[%s1 + $0x84] sm:$0xf]
  %v65 = vld [vmem:[%s1 + $0x88] sm:$0xf]
  %v66 = vld [vmem:[%s1 + $0x8c] sm:$0xf]
  %v67 = vld [vmem:[%s1 + $0x90] sm:$0xf]
  %v68 = vld [vmem:[%s1 + $0x94] sm:$0xf]
  %v69 = vld [vmem:[%s1 + $0x98] sm:$0xf]
  %v70 = vld [vmem:[%s1 + $0x9c] sm:$0xf]
  %v71 = vld [vmem:[%s1 + $0xa0] sm:$0xf]
  %v72 = vld [vmem:[%s1 + $0xa4] sm:$0xf]
  %v73 = vld [vmem:[%s1 + $0xa8] sm:$0xf]
  %v74 = vld [vmem:[%s1 + $0xac] sm:$0xf]
  %v75 = vld [vmem:[%s1 + $0xb0] sm:$0xf]
  %v76 = vld [vmem:[%s1 + $0xb4] sm:$0xf]
  %v77 = vld [vmem:[%s1 + $0xb8] sm:$0xf]
  %v78 = vld [vmem:[%s1 + $0xbc] sm:$0xf]
  %v79 = vld [vmem:[%s1 + $0xc0] sm:$0xf]
  %v80 = vld [vmem:[%s1 + $0xc4] sm:$0xf]
  %v81 = vld [vmem:[%s1 + $0xc8] sm:$0xf]
  %v82 = vld [vmem:[%s1 + $0xcc] sm:$0xf]
  %v83 = vld [vmem:[%s1 + $0xd0] sm:$0xf]
  %v84 = vld [vmem:[%s1 + $0xd4] sm:$0xf]
  %v85 = vld [vmem:[%s1 + $0xd8] sm:$0xf]
  %v86 = vld [vmem:[%s1 + $0xdc] sm:$0xf]
  %v87 = vld [vmem:[%s1 + $0xe0] sm:$0xf]
  %v88 = vld [vmem:[%s1 + $0xe4] sm:$0xf]
  %v89 = vld [vmem:[%s1 + $0xe8] sm:$0xf]
  %v90 = vld [vmem:[%s1 + $0xec] sm:$0xf]
  %v91 = vld [vmem:[%s1 + $0xf0] sm:$0xf]
  %v92 = vld [vmem:[%s1 + $0xf4] sm:$0xf]
  %v93 = vld [vmem:[%s1 + $0xf8] sm:$0xf]
  %v94 = vld [vmem:[%s1 + $0xfc] sm:$0xf]
  %v95 = vld [vmem:[%s1 + $0x100] sm:$0xf]
  %v96 = vld [vmem:[%s1 + $0x104] sm:$0xf]
  %v97 = vld [vmem:[%s1 + $0x108] sm:$0xf]
  %v98 = vld [vmem:[%s1 + $0x10c] sm:$0xf]
  %v99 = vld [vmem:[%s1 + $0x110] sm:$0xf]
  %v100 = vld [vmem:[%s1 + $0x114] sm:$0xf]
  %v101 = vld [vmem:[%s1 + $0x118] sm:$0xf]
  %v102 = vld [vmem:[%s1 + $0x11c] sm:$0xf]
  %v103 = vld [vmem:[%s1 + $0x120] sm:$0xf]
  %v104 = vld [vmem:[%s1 + $0x124] sm:$0xf]
  %v105 = vld [vmem:[%s1 + $0x128] sm:$0xf]
  %v106 = vld [vmem:[%s1 + $0x12c] sm:$0xf]
  %v107 = vld [vmem:[%s1 + $0x130] sm:$0xf]
  %v108 = vld [vmem:[%s1 + $0x134] sm:$0xf]
  %v109 = vld [vmem:[%s1 + $0x138] sm:$0xf]
  %v110 = vld [vmem:[%s1 + $0x13c] sm:$0xf]
  %v111 = vld [vmem:[%s1 + $0x140] sm:$0xf]
  %v112 = vld [vmem:[%s1 + $0x144] sm:$0xf]
  %v113 = vld [vmem:[%s1 + $0x148] sm:$0xf]
  %v114 = vld [vmem:[%s1 + $0x14c] sm:$0xf]
  %v115 = vld [vmem:[%s1 + $0x150] sm:$0xf]
  %v116 = vld [vmem:[%s1 + $0x154] sm:$0xf]
  %v117 = vld [vmem:[%s1 + $0x158] sm:$0xf]
  %v118 = vld [vmem:[%s1 + $0x15c] sm:$0xf]
  %v119 = vld [vmem:[%s1 + $0x160] sm:$0xf]
  %v120 = vld [vmem:[%s1 + $0x164] sm:$0xf]
  %v121 = vld [vmem:[%s1 + $0x168] sm:$0xf]
  %v122 = vld [vmem:[%s1 + $0x16c] sm:$0xf]
  %v123 = vld [vmem:[%s1 + $0x170] sm:$0xf]
  %v124 = vld [vmem:[%s1 + $0x174] sm:$0xf]
  %v125 = vld [vmem:[%s1 + $0x178] sm:$0xf]
  %v126 = vld [vmem:[%s1 + $0x17c] sm:$0xf]
  %v127 = vld [vmem:[%s1 + $0x180] sm:$0xf]
  %v128 = vld [vmem:[%s1 + $0x184] sm:$0xf]
  %v129 = vld [vmem:[%s1 + $0x188] sm:$0xf]
  %v130 = vld [vmem:[%s1 + $0x18c] sm:$0xf]
  %v131 = vld [vmem:[%s1 + $0x190] sm:$0xf]
  %v132 = vld [vmem:[%s1 + $0x194] sm:$0xf]
  %v133 = vld [vmem:[%s1 + $0x198] sm:$0xf]
  %v134 = vld [vmem:[%s1 + $0x19c] sm:$0xf]
  %v135 = vld [vmem:[%s1 + $0x1a0] sm:$0xf]
  %v136 = vld [vmem:[%s1 + $0x1a4] sm:$0xf]
  %v137 = vld [vmem:[%s1 + $0x1a8] sm:$0xf]
  %v138 = vld [vmem:[%s1 + $0x1ac] sm:$0xf]
  %v139 = vld [vmem:[%s1 + $0x1b0] sm:$0xf]
  %v140 = vld [vmem:[%s1 + $0x1b4] sm:$0xf]
  %v141 = vld [vmem:[%s1 + $0x1b8] sm:$0xf]
  %v142 = vld [vmem:[%s1 + $0x1bc] sm:$0xf]
  %v143 = vld [vmem:[%s1 + $0x1c0] sm:$0xf]
  %v144 = vld [vmem:[%s1 + $0x1c4] sm:$0xf]
  %v145 = vld [vmem:[%s1 + $0x1c8] sm:$0xf]
  %v146 = vld [vmem:[%s1 + $0x1cc] sm:$0xf]
  %v147 = vld [vmem:[%s1 + $0x1d0] sm:$0xf]
  %v148 = vld [vmem:[%s1 + $0x1d4] sm:$0xf]
  %v149 = vld [vmem:[%s1 + $0x1d8] sm:$0xf]
  %v150 = vld [vmem:[%s1 + $0x1dc] sm:$0xf]
  %v151 = vld [vmem:[%s1 + $0x1e0] sm:$0xf]
  %v152 = vld [vmem:[%s1 + $0x1e4] sm:$0xf]
  %v153 = vld [vmem:[%s1 + $0x1e8] sm:$0xf]
  %v154 = vld [vmem:[%s1 + $0x1ec] sm:$0xf]
  %v155 = vld [vmem:[%s1 + $0x1f0] sm:$0xf]
  %v156 = vld [vmem:[%s1 + $0x1f4] sm:$0xf]
  %v157 = vld [vmem:[%s1 + $0x1f8] sm:$0xf]
  %v158 = vld [vmem:[%s1 + $0x1fc] sm:$0xf]
  %v159 = vld [vmem:[%s2] sm:$0x1]
  %v161 = vlaneseq
  %v162 = vshrl.u32 %v161, 7
  %v163 = vsub.s32 0, %v162
  %v164 = vrot.slane %v159, %v163
  %v170 = vunpack.c.l.b16 %v27
  %v171 = vunpack.c.h.b16 %v27
  %v172 = vunpack.c.l.b16 %v28
  %v173 = vunpack.c.h.b16 %v28
  %v174 = vunpack.c.l.b16 %v29
  %v175 = vunpack.c.h.b16 %v29
  %v176 = vunpack.c.l.b16 %v30
  %v177 = vunpack.c.h.b16 %v30
  %v178 = vpack.c.b16 %v170, %v170
  %v179 = vpack.c.b16 %v171, %v171
  %v180 = vpack.c.b16 %v172, %v172
  %v181 = vpack.c.b16 %v173, %v173
  %v182 = vpack.c.b16 %v174, %v174
  %v183 = vpack.c.b16 %v175, %v175
  %v184 = vpack.c.b16 %v176, %v176
  %v185 = vpack.c.b16 %v177, %v177
  %v322 = vunpack.c.l.b16 %v31
  %v323 = vunpack.c.l.b16 %v32
  %v324 = vunpack.c.l.b16 %v33
  %v325 = vunpack.c.l.b16 %v34
  %v326 = vunpack.c.l.b16 %v35
  %v327 = vunpack.c.l.b16 %v36
  %v328 = vunpack.c.l.b16 %v37
  %v329 = vunpack.c.l.b16 %v38
  %v330 = vunpack.c.l.b16 %v39
  %v331 = vunpack.c.l.b16 %v40
  %v332 = vunpack.c.l.b16 %v41
  %v333 = vunpack.c.l.b16 %v42
  %v334 = vunpack.c.l.b16 %v43
  %v335 = vunpack.c.l.b16 %v44
  %v336 = vunpack.c.l.b16 %v45
  %v337 = vunpack.c.l.b16 %v46
  %v338 = vunpack.c.l.b16 %v47
  %v339 = vunpack.c.l.b16 %v48
  %v340 = vunpack.c.l.b16 %v49
  %v341 = vunpack.c.l.b16 %v50
  %v342 = vunpack.c.l.b16 %v51
  %v343 = vunpack.c.l.b16 %v52
  %v344 = vunpack.c.l.b16 %v53
  %v345 = vunpack.c.l.b16 %v54
  %v346 = vunpack.c.l.b16 %v55
  %v347 = vunpack.c.l.b16 %v56
  %v348 = vunpack.c.l.b16 %v57
  %v349 = vunpack.c.l.b16 %v58
  %v350 = vunpack.c.l.b16 %v59
  %v351 = vunpack.c.l.b16 %v60
  %v352 = vunpack.c.l.b16 %v61
  %v353 = vunpack.c.l.b16 %v62
  %v354 = vunpack.c.l.b16 %v63
  %v355 = vunpack.c.l.b16 %v64
  %v356 = vunpack.c.l.b16 %v65
  %v357 = vunpack.c.l.b16 %v66
  %v358 = vunpack.c.l.b16 %v67
  %v359 = vunpack.c.l.b16 %v68
  %v360 = vunpack.c.l.b16 %v69
  %v361 = vunpack.c.l.b16 %v70
  %v362 = vunpack.c.l.b16 %v71
  %v363 = vunpack.c.l.b16 %v72
  %v364 = vunpack.c.l.b16 %v73
  %v365 = vunpack.c.l.b16 %v74
  %v366 = vunpack.c.l.b16 %v75
  %v367 = vunpack.c.l.b16 %v76
  %v368 = vunpack.c.l.b16 %v77
  %v369 = vunpack.c.l.b16 %v78
  %v370 = vunpack.c.l.b16 %v79
  %v371 = vunpack.c.l.b16 %v80
  %v372 = vunpack.c.l.b16 %v81
  %v373 = vunpack.c.l.b16 %v82
  %v374 = vunpack.c.l.b16 %v83
  %v375 = vunpack.c.l.b16 %v84
  %v376 = vunpack.c.l.b16 %v85
  %v377 = vunpack.c.l.b16 %v86
  %v378 = vunpack.c.l.b16 %v87
  %v379 = vunpack.c.l.b16 %v88
  %v380 = vunpack.c.l.b16 %v89
  %v381 = vunpack.c.l.b16 %v90
  %v382 = vunpack.c.l.b16 %v91
  %v383 = vunpack.c.l.b16 %v92
  %v384 = vunpack.c.l.b16 %v93
  %v385 = vunpack.c.l.b16 %v94
  %v386 = vunpack.c.l.b16 %v95
  %v387 = vunpack.c.l.b16 %v96
  %v388 = vunpack.c.l.b16 %v97
  %v389 = vunpack.c.l.b16 %v98
  %v390 = vunpack.c.l.b16 %v99
  %v391 = vunpack.c.l.b16 %v100
  %v392 = vunpack.c.l.b16 %v101
  %v393 = vunpack.c.l.b16 %v102
  %v394 = vunpack.c.l.b16 %v103
  %v395 = vunpack.c.l.b16 %v104
  %v396 = vunpack.c.l.b16 %v105
  %v397 = vunpack.c.l.b16 %v106
  %v398 = vunpack.c.l.b16 %v107
  %v399 = vunpack.c.l.b16 %v108
  %v400 = vunpack.c.l.b16 %v109
  %v401 = vunpack.c.l.b16 %v110
  %v402 = vunpack.c.l.b16 %v111
  %v403 = vunpack.c.l.b16 %v112
  %v404 = vunpack.c.l.b16 %v113
  %v405 = vunpack.c.l.b16 %v114
  %v406 = vunpack.c.l.b16 %v115
  %v407 = vunpack.c.l.b16 %v116
  %v408 = vunpack.c.l.b16 %v117
  %v409 = vunpack.c.l.b16 %v118
  %v410 = vunpack.c.l.b16 %v119
  %v411 = vunpack.c.l.b16 %v120
  %v412 = vunpack.c.l.b16 %v121
  %v413 = vunpack.c.l.b16 %v122
  %v414 = vunpack.c.l.b16 %v123
  %v415 = vunpack.c.l.b16 %v124
  %v416 = vunpack.c.l.b16 %v125
  %v417 = vunpack.c.l.b16 %v126
  %v418 = vunpack.c.l.b16 %v127
  %v419 = vunpack.c.l.b16 %v128
  %v420 = vunpack.c.l.b16 %v129
  %v421 = vunpack.c.l.b16 %v130
  %v422 = vunpack.c.l.b16 %v131
  %v423 = vunpack.c.l.b16 %v132
  %v424 = vunpack.c.l.b16 %v133
  %v425 = vunpack.c.l.b16 %v134
  %v426 = vunpack.c.l.b16 %v135
  %v427 = vunpack.c.l.b16 %v136
  %v428 = vunpack.c.l.b16 %v137
  %v429 = vunpack.c.l.b16 %v138
  %v430 = vunpack.c.l.b16 %v139
  %v431 = vunpack.c.l.b16 %v140
  %v432 = vunpack.c.l.b16 %v141
  %v433 = vunpack.c.l.b16 %v142
  %v434 = vunpack.c.l.b16 %v143
  %v435 = vunpack.c.l.b16 %v144
  %v436 = vunpack.c.l.b16 %v145
  %v437 = vunpack.c.l.b16 %v146
  %v438 = vunpack.c.l.b16 %v147
  %v439 = vunpack.c.l.b16 %v148
  %v440 = vunpack.c.l.b16 %v149
  %v441 = vunpack.c.l.b16 %v150
  %v442 = vunpack.c.l.b16 %v151
  %v443 = vunpack.c.l.b16 %v152
  %v444 = vunpack.c.l.b16 %v153
  %v445 = vunpack.c.l.b16 %v154
  %v446 = vunpack.c.l.b16 %v155
  %v447 = vunpack.c.l.b16 %v156
  %v448 = vunpack.c.l.b16 %v157
  %v449 = vunpack.c.l.b16 %v158
  %v450 = vpack.c.b16 %v323, %v322
  %v451 = vpack.c.b16 %v325, %v324
  %v452 = vpack.c.b16 %v327, %v326
  %v453 = vpack.c.b16 %v329, %v328
  %v454 = vpack.c.b16 %v331, %v330
  %v455 = vpack.c.b16 %v333, %v332
  %v456 = vpack.c.b16 %v335, %v334
  %v457 = vpack.c.b16 %v337, %v336
  %v458 = vpack.c.b16 %v339, %v338
  %v459 = vpack.c.b16 %v341, %v340
  %v460 = vpack.c.b16 %v343, %v342
  %v461 = vpack.c.b16 %v345, %v344
  %v462 = vpack.c.b16 %v347, %v346
  %v463 = vpack.c.b16 %v349, %v348
  %v464 = vpack.c.b16 %v351, %v350
  %v465 = vpack.c.b16 %v353, %v352
  %v466 = vpack.c.b16 %v355, %v354
  %v467 = vpack.c.b16 %v357, %v356
  %v468 = vpack.c.b16 %v359, %v358
  %v469 = vpack.c.b16 %v361, %v360
  %v470 = vpack.c.b16 %v363, %v362
  %v471 = vpack.c.b16 %v365, %v364
  %v472 = vpack.c.b16 %v367, %v366
  %v473 = vpack.c.b16 %v369, %v368
  %v474 = vpack.c.b16 %v371, %v370
  %v475 = vpack.c.b16 %v373, %v372
  %v476 = vpack.c.b16 %v375, %v374
  %v477 = vpack.c.b16 %v377, %v376
  %v478 = vpack.c.b16 %v379, %v378
  %v479 = vpack.c.b16 %v381, %v380
  %v480 = vpack.c.b16 %v383, %v382
  %v481 = vpack.c.b16 %v385, %v384
  %v482 = vpack.c.b16 %v387, %v386
  %v483 = vpack.c.b16 %v389, %v388
  %v484 = vpack.c.b16 %v391, %v390
  %v485 = vpack.c.b16 %v393, %v392
  %v486 = vpack.c.b16 %v395, %v394
  %v487 = vpack.c.b16 %v397, %v396
  %v488 = vpack.c.b16 %v399, %v398
  %v489 = vpack.c.b16 %v401, %v400
  %v490 = vpack.c.b16 %v403, %v402
  %v491 = vpack.c.b16 %v405, %v404
  %v492 = vpack.c.b16 %v407, %v406
  %v493 = vpack.c.b16 %v409, %v408
  %v494 = vpack.c.b16 %v411, %v410
  %v495 = vpack.c.b16 %v413, %v412
  %v496 = vpack.c.b16 %v415, %v414
  %v497 = vpack.c.b16 %v417, %v416
  %v498 = vpack.c.b16 %v419, %v418
  %v499 = vpack.c.b16 %v421, %v420
  %v500 = vpack.c.b16 %v423, %v422
  %v501 = vpack.c.b16 %v425, %v424
  %v502 = vpack.c.b16 %v427, %v426
  %v503 = vpack.c.b16 %v429, %v428
  %v504 = vpack.c.b16 %v431, %v430
  %v505 = vpack.c.b16 %v433, %v432
  %v506 = vpack.c.b16 %v435, %v434
  %v507 = vpack.c.b16 %v437, %v436
  %v508 = vpack.c.b16 %v439, %v438
  %v509 = vpack.c.b16 %v441, %v440
  %v510 = vpack.c.b16 %v443, %v442
  %v511 = vpack.c.b16 %v445, %v444
  %v512 = vpack.c.b16 %v447, %v446
  %v513 = vpack.c.b16 %v449, %v448
  %578 = vmatprep.subr.bf16.mxu0 0
  %579 = vmatpush1.bf16.msra.mxu0 %v450
  %580 = vmatprep.subr.bf16.mxu0 0
  %581 = vmatpush1.bf16.msra.mxu0 %v451
  %582 = vmatprep.subr.bf16.mxu0 0
  %583 = vmatpush1.bf16.msra.mxu0 %v452
  %584 = vmatprep.subr.bf16.mxu0 0
  %585 = vmatpush1.bf16.msra.mxu0 %v453
  %586 = vmatprep.subr.bf16.mxu0 0
  %587 = vmatpush1.bf16.msra.mxu0 %v454
  %588 = vmatprep.subr.bf16.mxu0 0
  %589 = vmatpush1.bf16.msra.mxu0 %v455
  %590 = vmatprep.subr.bf16.mxu0 0
  %591 = vmatpush1.bf16.msra.mxu0 %v456
  %592 = vmatprep.subr.bf16.mxu0 0
  %593 = vmatpush1.bf16.msra.mxu0 %v457
  %594 = vmatprep.subr.bf16.mxu0 0
  %595 = vmatpush1.bf16.msra.mxu0 %v458
  %596 = vmatprep.subr.bf16.mxu0 0
  %597 = vmatpush1.bf16.msra.mxu0 %v459
  %598 = vmatprep.subr.bf16.mxu0 0
  %599 = vmatpush1.bf16.msra.mxu0 %v460
  %600 = vmatprep.subr.bf16.mxu0 0
  %601 = vmatpush1.bf16.msra.mxu0 %v461
  %602 = vmatprep.subr.bf16.mxu0 0
  %603 = vmatpush1.bf16.msra.mxu0 %v462
  %604 = vmatprep.subr.bf16.mxu0 0
  %605 = vmatpush1.bf16.msra.mxu0 %v463
  %606 = vmatprep.subr.bf16.mxu0 0
  %607 = vmatpush1.bf16.msra.mxu0 %v464
  %608 = vmatprep.subr.bf16.mxu0 0
  %609 = vmatpush1.bf16.msra.mxu0 %v465
  %610 = vmatprep.mubr.bf16.mxu0 %v179
  %611 = vmatmul.mubr.bf16.gmra.mrb[0].mxu0 %v178
  %v612 = vpop.f32.mrb[0].mxu0
  %v613 = vadd.f32 %v164, %v612
  %v614 = vpop.f32.mrb[0].mxu0
  %v615 = vpop.f32.mrb[0].mxu0
  %v616 = vpop.f32.mrb[0].mxu0
  %617 = vdwg.mxu0
  %618 = vmatprep.subr.bf16.mxu0 0
  %619 = vmatpush1.bf16.msra.mxu0 %v466
  %620 = vmatprep.subr.bf16.mxu0 0
  %621 = vmatpush1.bf16.msra.mxu0 %v467
  %622 = vmatprep.subr.bf16.mxu0 0
  %623 = vmatpush1.bf16.msra.mxu0 %v468
  %624 = vmatprep.subr.bf16.mxu0 0
  %625 = vmatpush1.bf16.msra.mxu0 %v469
  %626 = vmatprep.subr.bf16.mxu0 0
  %627 = vmatpush1.bf16.msra.mxu0 %v470
  %628 = vmatprep.subr.bf16.mxu0 0
  %629 = vmatpush1.bf16.msra.mxu0 %v471
  %630 = vmatprep.subr.bf16.mxu0 0
  %631 = vmatpush1.bf16.msra.mxu0 %v472
  %632 = vmatprep.subr.bf16.mxu0 0
  %633 = vmatpush1.bf16.msra.mxu0 %v473
  %634 = vmatprep.subr.bf16.mxu0 0
  %635 = vmatpush1.bf16.msra.mxu0 %v474
  %636 = vmatprep.subr.bf16.mxu0 0
  %637 = vmatpush1.bf16.msra.mxu0 %v475
  %638 = vmatprep.subr.bf16.mxu0 0
  %639 = vmatpush1.bf16.msra.mxu0 %v476
  %640 = vmatprep.subr.bf16.mxu0 0
  %641 = vmatpush1.bf16.msra.mxu0 %v477
  %642 = vmatprep.subr.bf16.mxu0 0
  %643 = vmatpush1.bf16.msra.mxu0 %v478
  %644 = vmatprep.subr.bf16.mxu0 0
  %645 = vmatpush1.bf16.msra.mxu0 %v479
  %646 = vmatprep.subr.bf16.mxu0 0
  %647 = vmatpush1.bf16.msra.mxu0 %v480
  %648 = vmatprep.subr.bf16.mxu0 0
  %649 = vmatpush1.bf16.msra.mxu0 %v481
  %650 = vmatprep.mubr.bf16.mxu0 %v181
  %651 = vmatmul.mubr.bf16.gmra.mrb[0].mxu0 %v180
  %v652 = vpop.f32.mrb[0].mxu0
  %v653 = vadd.f32 %v613, %v652
  %v654 = vpop.f32.mrb[0].mxu0
  %v655 = vpop.f32.mrb[0].mxu0
  %v656 = vpop.f32.mrb[0].mxu0
  %657 = vdwg.mxu0
  %658 = vmatprep.subr.bf16.mxu0 0
  %659 = vmatpush1.bf16.msra.mxu0 %v482
  %660 = vmatprep.subr.bf16.mxu0 0
  %661 = vmatpush1.bf16.msra.mxu0 %v483
  %662 = vmatprep.subr.bf16.mxu0 0
  %663 = vmatpush1.bf16.msra.mxu0 %v484
  %664 = vmatprep.subr.bf16.mxu0 0
  %665 = vmatpush1.bf16.msra.mxu0 %v485
  %666 = vmatprep.subr.bf16.mxu0 0
  %667 = vmatpush1.bf16.msra.mxu0 %v486
  %668 = vmatprep.subr.bf16.mxu0 0
  %669 = vmatpush1.bf16.msra.mxu0 %v487
  %670 = vmatprep.subr.bf16.mxu0 0
  %671 = vmatpush1.bf16.msra.mxu0 %v488
  %672 = vmatprep.subr.bf16.mxu0 0
  %673 = vmatpush1.bf16.msra.mxu0 %v489
  %674 = vmatprep.subr.bf16.mxu0 0
  %675 = vmatpush1.bf16.msra.mxu0 %v490
  %676 = vmatprep.subr.bf16.mxu0 0
  %677 = vmatpush1.bf16.msra.mxu0 %v491
  %678 = vmatprep.subr.bf16.mxu0 0
  %679 = vmatpush1.bf16.msra.mxu0 %v492
  %680 = vmatprep.subr.bf16.mxu0 0
  %681 = vmatpush1.bf16.msra.mxu0 %v493
  %682 = vmatprep.subr.bf16.mxu0 0
  %683 = vmatpush1.bf16.msra.mxu0 %v494
  %684 = vmatprep.subr.bf16.mxu0 0
  %685 = vmatpush1.bf16.msra.mxu0 %v495
  %686 = vmatprep.subr.bf16.mxu0 0
  %687 = vmatpush1.bf16.msra.mxu0 %v496
  %688 = vmatprep.subr.bf16.mxu0 0
  %689 = vmatpush1.bf16.msra.mxu0 %v497
  %690 = vmatprep.mubr.bf16.mxu0 %v183
  %691 = vmatmul.mubr.bf16.gmra.mrb[0].mxu0 %v182
  %v692 = vpop.f32.mrb[0].mxu0
  %v693 = vadd.f32 %v653, %v692
  %v694 = vpop.f32.mrb[0].mxu0
  %v695 = vpop.f32.mrb[0].mxu0
  %v696 = vpop.f32.mrb[0].mxu0
  %697 = vdwg.mxu0
  %698 = vmatprep.subr.bf16.mxu0 0
  %699 = vmatpush1.bf16.msra.mxu0 %v498
  %700 = vmatprep.subr.bf16.mxu0 0
  %701 = vmatpush1.bf16.msra.mxu0 %v499
  %702 = vmatprep.subr.bf16.mxu0 0
  %703 = vmatpush1.bf16.msra.mxu0 %v500
  %704 = vmatprep.subr.bf16.mxu0 0
  %705 = vmatpush1.bf16.msra.mxu0 %v501
  %706 = vmatprep.subr.bf16.mxu0 0
  %707 = vmatpush1.bf16.msra.mxu0 %v502
  %708 = vmatprep.subr.bf16.mxu0 0
  %709 = vmatpush1.bf16.msra.mxu0 %v503
  %710 = vmatprep.subr.bf16.mxu0 0
  %711 = vmatpush1.bf16.msra.mxu0 %v504
  %712 = vmatprep.subr.bf16.mxu0 0
  %713 = vmatpush1.bf16.msra.mxu0 %v505
  %714 = vmatprep.subr.bf16.mxu0 0
  %715 = vmatpush1.bf16.msra.mxu0 %v506
  %716 = vmatprep.subr.bf16.mxu0 0
  %717 = vmatpush1.bf16.msra.mxu0 %v507
  %718 = vmatprep.subr.bf16.mxu0 0
  %719 = vmatpush1.bf16.msra.mxu0 %v508
  %720 = vmatprep.subr.bf16.mxu0 0
  %721 = vmatpush1.bf16.msra.mxu0 %v509
  %722 = vmatprep.subr.bf16.mxu0 0
  %723 = vmatpush1.bf16.msra.mxu0 %v510
  %724 = vmatprep.subr.bf16.mxu0 0
  %725 = vmatpush1.bf16.msra.mxu0 %v511
  %726 = vmatprep.subr.bf16.mxu0 0
  %727 = vmatpush1.bf16.msra.mxu0 %v512
  %728 = vmatprep.subr.bf16.mxu0 0
  %729 = vmatpush1.bf16.msra.mxu0 %v513
  %730 = vmatprep.mubr.bf16.mxu0 %v185
  %731 = vmatmul.mubr.bf16.gmra.mrb[0].mxu0 %v184
  %v732 = vpop.f32.mrb[0].mxu0
  %v733 = vadd.f32 %v693, %v732
  %v734 = vpop.f32.mrb[0].mxu0
  %v735 = vpop.f32.mrb[0].mxu0
  %v736 = vpop.f32.mrb[0].mxu0
  %737 = vdwg.mxu0
  %vm738 = vcmask 15360
  %739 = vst.msk [vmem:[%s6] sm:$0xff] %vm738, %v733
  %s740 = sld [smem:[#allocation2]]
  %vm741 = vcmp.ge.f32.partialorder %v733, 0.0
  %v742 = vstv %s740
  %v743 = vmul.f32 %v742, %v733
  %v744 = vsel %vm741, %v733, %v743
  %v745 = vpack.c.bf16 %v744, %v744
  %v746 = vld [vmem:[%s4] sm:$0x1]
  %v747 = vld [vmem:[%s5] sm:$0x1]
  %v749 = vlaneseq
  %v750 = vshrl.u32 %v749, 7
  %v751 = vsub.s32 0, %v750
  %v752 = vrot.slane %v747, %v751
  %v755 = vsel %vm738, %v745, 0
  %vm757 = vcmask 1040384
  %v759 = vsel %vm757, %v746, 0
  %761 = vmatprep.subr.bf16.mxu0 0
  %762 = vmatpush1.bf16.msra.mxu0 %v759
  %763 = vmatprep.subr.bf16.mxu0 0
  %764 = vmatpush1.bf16.msra.mxu0 0
  %765 = vmatprep.subr.bf16.mxu0 0
  %766 = vmatpush1.bf16.msra.mxu0 0
  %767 = vmatprep.subr.bf16.mxu0 0
  %768 = vmatpush1.bf16.msra.mxu0 0
  %769 = vmatprep.subr.bf16.mxu0 0
  %770 = vmatpush1.bf16.msra.mxu0 0
  %771 = vmatprep.subr.bf16.mxu0 0
  %772 = vmatpush1.bf16.msra.mxu0 0
  %773 = vmatprep.subr.bf16.mxu0 0
  %774 = vmatpush1.bf16.msra.mxu0 0
  %775 = vmatprep.subr.bf16.mxu0 0
  %776 = vmatpush1.bf16.msra.mxu0 0
  %777 = vmatprep.subr.bf16.mxu0 0
  %778 = vmatpush1.bf16.msra.mxu0 0
  %779 = vmatprep.subr.bf16.mxu0 0
  %780 = vmatpush1.bf16.msra.mxu0 0
  %781 = vmatprep.subr.bf16.mxu0 0
  %782 = vmatpush1.bf16.msra.mxu0 0
  %783 = vmatprep.subr.bf16.mxu0 0
  %784 = vmatpush1.bf16.msra.mxu0 0
  %785 = vmatprep.subr.bf16.mxu0 0
  %786 = vmatpush1.bf16.msra.mxu0 0
  %787 = vmatprep.subr.bf16.mxu0 0
  %788 = vmatpush1.bf16.msra.mxu0 0
  %789 = vmatprep.subr.bf16.mxu0 0
  %790 = vmatpush1.bf16.msra.mxu0 0
  %791 = vmatprep.subr.bf16.mxu0 0
  %792 = vmatpush1.bf16.msra.mxu0 0
  %793 = vmatprep.mubr.bf16.mxu0 0
  %794 = vmatmul.mubr.bf16.gmra.mrb[0].mxu0 %v755
  %v795 = vpop.f32.mrb[0].mxu0
  %v796 = vadd.f32 %v752, %v795
  %v797 = vpop.f32.mrb[0].mxu0
  %v798 = vpop.f32.mrb[0].mxu0
  %v799 = vpop.f32.mrb[0].mxu0
  %800 = vdwg.mxu0
  %vm801 = vcmask 80896
  %v802 = vsel %vm801, %v796, -inf
  %803 = vmax.xlane.f32.xlu0 %v802
  %v804 = vpop.xlane.xlu0 %803
  %v805 = vsub.f32 %v796, %v804
  %v806 = vmul.f32 %v805, 1.442695
  %v807 = vpow.pop %v806
  %v808 = vsel %vm801, %v807, 0.0
  %809 = vadd.xlane.f32.xlu0 %v808
  %v810 = vpop.xlane.xlu0 %809
  %v811 = vlog2.pop %v810
  %v812 = vmul.f32 %v811, 0.6931472
  %v813 = vadd.f32 %v804, %v812
  %v814 = vsub.f32 %v796, %v813
  %815 = vst.msk [vmem:[%s7] sm:$0xff] %vm801, %v814
  // Predicated region
  $region26: #{two_layer_ce_forward.1} parent=0 // pred_check
    _
  $region27: #{two_layer_ce_forward.1} parent=0 // pred_check_branch
    %817 = sbr.rel (0) target = $region29
  $region28: #{two_layer_ce_forward.1} parent=0 // pred_region
    _
  $region29: #{two_layer_ce_forward.1} parent=0 // pred_fallthru
    _
  // Predicated region
  $region30: #{two_layer_ce_forward.1} parent=0 // pred_check
    _
  $region31: #{two_layer_ce_forward.1} parent=0 // pred_check_branch
    %819 = sbr.rel (0) target = $region33
  $region32: #{two_layer_ce_forward.1} parent=0 // pred_region
    _
  $region33: #{two_layer_ce_forward.1} parent=0 // pred_fallthru
    _
  // Predicated region
  $region34: #{two_layer_ce_forward.1} parent=0 // pred_check
    _
  $region35: #{two_layer_ce_forward.1} parent=0 // pred_check_branch
    %821 = sbr.rel (0) target = $region37
  $region36: #{two_layer_ce_forward.1} parent=0 // pred_region
    _
  $region37: #{two_layer_ce_forward.1} parent=0 // pred_fallthru
    _
  // Predicated region
  $region38: #{two_layer_ce_forward.1} parent=0 // pred_check
    _
  $region39: #{two_layer_ce_forward.1} parent=0 // pred_check_branch
    %823 = sbr.rel (0) target = $region41
  $region40: #{two_layer_ce_forward.1} parent=0 // pred_region
    _
  $region41: #{two_layer_ce_forward.1} parent=0 // pred_fallthru
    _

</llo_original>
